<compile_context>
chip_gen: v6e
topology: v6e:2x2x1
jax: 0.10.0
libtpu: 0.0.40
codegen_flags: <defaults>
</compile_context>

<pallas_src>
import functools

import jax
import jax.numpy as jnp
from jax import lax
from jax.experimental import pallas as pl
from jax.experimental.pallas import tpu as pltpu


def _hash_random_bits(shape, row_offset, seed_u32, salt):
    """Stateless counter-based uint32 bits keyed on (global row, col, seed, salt)."""
    rows = lax.broadcasted_iota(jnp.int32, shape, 0).astype(jnp.uint32) + row_offset
    cols = lax.broadcasted_iota(jnp.int32, shape, 1).astype(jnp.uint32)
    x = rows * jnp.uint32(0x9E3779B1)
    x = x ^ (cols * jnp.uint32(0x85EBCA77))
    x = x ^ (seed_u32 + jnp.uint32(salt))
    # murmur3 fmix32 finalizer
    x = x ^ (x >> 16)
    x = x * jnp.uint32(0x7FEB352D)
    x = x ^ (x >> 15)
    x = x * jnp.uint32(0x846CA68B)
    x = x ^ (x >> 16)
    return x


def _dropout(h, bits, dropout_rate):
    """Inverted dropout (F.dropout(training=True)); keep-test in integer domain."""
    thresh = jnp.uint32(int((1.0 - dropout_rate) * (1 << 24)))
    keep = (bits & jnp.uint32(0x00FFFFFF)) < thresh
    scale = jnp.float32(1.0 / (1.0 - dropout_rate))
    return jnp.where(keep, h * scale, jnp.float32(0.0))


def mel_prenet_kernel(seed_ref,                       # SMEM scalar-prefetch seed (1,)
                      x_ref,                          # (TM, idim_pad)   f32
                      w1_ref, b1_ref,                 # (idim_pad, nU) bf16, (1, nU) f32
                      w2_ref, b2_ref,                 # (nU, nU) bf16,      (1, nU) f32
                      w3_ref, b3_ref,                 # (nU, odim) bf16,    (1, odim) f32
                      out_ref,                        # (TM, odim)
                      *, dropout_rate, block_rows):
    seed_u32 = seed_ref[0].astype(jnp.uint32)
    row0 = (pl.program_id(0) * block_rows).astype(jnp.uint32)   # global row offset of tile

    x = x_ref[...].astype(jnp.bfloat16)

    # layer 1: Linear + ReLU + dropout
    h1 = jnp.dot(x, w1_ref[...], preferred_element_type=jnp.float32) + b1_ref[...]
    h1 = jnp.maximum(h1, 0.0)
    if 0.0 < dropout_rate < 1.0:
        h1 = _dropout(h1, _hash_random_bits(h1.shape, row0, seed_u32, 0x1), dropout_rate)
    elif dropout_rate >= 1.0:
        h1 = jnp.zeros_like(h1)

    # layer 2: Linear + ReLU + dropout
    h2 = jnp.dot(h1.astype(jnp.bfloat16), w2_ref[...],
                 preferred_element_type=jnp.float32) + b2_ref[...]
    h2 = jnp.maximum(h2, 0.0)
    if 0.0 < dropout_rate < 1.0:
        h2 = _dropout(h2, _hash_random_bits(h2.shape, row0, seed_u32, 0x2), dropout_rate)
    elif dropout_rate >= 1.0:
        h2 = jnp.zeros_like(h2)

    # output layer: Linear (no activation / dropout)
    out = jnp.dot(h2.astype(jnp.bfloat16), w3_ref[...],
                  preferred_element_type=jnp.float32) + b3_ref[...]
    out_ref[...] = out.astype(out_ref.dtype)


def mel_prenet(x, params, *, dropout_rate=0.5, seed=0, block_rows=1024,
               out_dtype=jnp.float32):
    """x: [B, T, idim] -> [B, T, odim].  block_rows: row-tile size (sweep per chip;
    ~1024-2048 is safe for v7x's 64 MiB VMEM, larger OK on v5e/v6e)."""
    B, T, idim = x.shape
    w1, b1, w2, b2, w3, b3 = params
    n_units = w1.shape[1]
    odim = w3.shape[1]
    N = B * T

    # ---- wrapper-side layout plumbing (free) --------------------------------
    idim_pad = pl.cdiv(idim, 128) * 128                 # lane-align feature dim (80 -> 128)
    tm = int(block_rows)
    if N < tm:                                          # tiny inputs: shrink tile, keep 8-mult
        tm = max(8, pl.cdiv(N, 8) * 8)
    n_pad = pl.cdiv(N, tm) * tm                         # pad rows -> dense, unmasked stores

    x2d = jnp.zeros((n_pad, idim_pad), jnp.float32)
    x2d = x2d.at[:N, :idim].set(x.reshape(N, idim).astype(jnp.float32))

    # bf16 weights for the MXU (f32 accumulation in-kernel); biases stay f32
    w1p = jnp.zeros((idim_pad, n_units), jnp.bfloat16).at[:idim, :].set(
        w1.astype(jnp.bfloat16))
    w2p = w2.astype(jnp.bfloat16)
    w3p = w3.astype(jnp.bfloat16)
    b1p = b1.reshape(1, n_units).astype(jnp.float32)
    b2p = b2.reshape(1, n_units).astype(jnp.float32)
    b3p = b3.reshape(1, odim).astype(jnp.float32)

    seed_arr = jnp.asarray([seed], dtype=jnp.int32)

    kernel = functools.partial(mel_prenet_kernel,
                               dropout_rate=float(dropout_rate),
                               block_rows=tm)

    pinned = lambda i, seed_ref: (0, 0)                 # weights resident across row tiles

    out2d = pl.pallas_call(
        kernel,
        out_shape=jax.ShapeDtypeStruct((n_pad, odim), out_dtype),
        grid_spec=pltpu.PrefetchScalarGridSpec(
            num_scalar_prefetch=1,
            grid=(n_pad // tm,),
            in_specs=[
                pl.BlockSpec((tm, idim_pad), lambda i, seed_ref: (i, 0)),   # x
                pl.BlockSpec((idim_pad, n_units), pinned),                  # w1
                pl.BlockSpec((1, n_units), pinned),                         # b1
                pl.BlockSpec((n_units, n_units), pinned),                   # w2
                pl.BlockSpec((1, n_units), pinned),                         # b2
                pl.BlockSpec((n_units, odim), pinned),                      # w3
                pl.BlockSpec((1, odim), pinned),                            # b3
            ],
            out_specs=pl.BlockSpec((tm, odim), lambda i, seed_ref: (i, 0)),
        ),
        compiler_params=pltpu.CompilerParams(
            dimension_semantics=("parallel",),          # shards row tiles on v7x's 2 TCs
            vmem_limit_bytes=48 * 1024 * 1024,
        ),
    )(seed_arr, x2d, w1p, b1p, w2p, b2p, w3p, b3p)

    return out2d[:N].reshape(B, T, odim)


def init_params(key, idim=80, n_units=256, odim=1024):
    """Deterministic synthetic init; weights in (in, out) layout."""
    k1, k2, k3, k4, k5, k6 = jax.random.split(key, 6)
    w1 = jax.random.normal(k1, (idim, n_units), jnp.float32) * (1.0 / jnp.sqrt(idim))
    b1 = jax.random.normal(k2, (1, n_units), jnp.float32) * 0.01
    w2 = jax.random.normal(k3, (n_units, n_units), jnp.float32) * (1.0 / jnp.sqrt(n_units))
    b2 = jax.random.normal(k4, (1, n_units), jnp.float32) * 0.01
    w3 = jax.random.normal(k5, (n_units, odim), jnp.float32) * (1.0 / jnp.sqrt(n_units))
    b3 = jax.random.normal(k6, (1, odim), jnp.float32) * 0.01
    return (w1, b1, w2, b2, w3, b3)


if __name__ == "__main__":
    # Shapes implied by the module defaults: idim=80 -> 256 -> 256 -> 1024
    B, T, idim, n_units, odim = 2, 8, 80, 256, 1024
    key = jax.random.PRNGKey(0)
    kx, kp = jax.random.split(key)

    x = jax.random.normal(kx, (B, T, idim), jnp.float32)
    params = init_params(kp, idim=idim, n_units=n_units, odim=odim)
    w1, b1, w2, b2, w3, b3 = params

    # Deterministic check (dropout off) against a pure-JAX f32 reference.
    out0 = jax.block_until_ready(mel_prenet(x, params, dropout_rate=0.0, seed=0))
    r = jnp.maximum(x.reshape(-1, idim) @ w1 + b1, 0.0)
    r = jnp.maximum(r @ w2 + b2, 0.0)
    ref = (r @ w3 + b3).reshape(B, T, odim)
    assert out0.shape == (B, T, odim), out0.shape
    assert bool(jnp.allclose(out0, ref, rtol=5e-2, atol=5e-2)), \
        float(jnp.max(jnp.abs(out0 - ref)))

    # The actual prenet path: always-on dropout, p=0.5.
    out = jax.block_until_ready(mel_prenet(x, params, dropout_rate=0.5, seed=0))
    assert out.shape == (B, T, odim), out.shape
    assert bool(jnp.all(jnp.isfinite(out)))

    print("KERNEL_OK")
</pallas_src>

<mosaic_0001>
module attributes {stable_mosaic.version = 11 : i64} {
  func.func @mel_prenet_kernel(%arg0: i32, %arg1: memref<1xi32, #tpu.memory_space<smem>>, %arg2: memref<16x128xf32, #tpu.memory_space<vmem>>, %arg3: memref<128x256xbf16, #tpu.memory_space<vmem>>, %arg4: memref<1x256xf32, #tpu.memory_space<vmem>>, %arg5: memref<256x256xbf16, #tpu.memory_space<vmem>>, %arg6: memref<1x256xf32, #tpu.memory_space<vmem>>, %arg7: memref<256x1024xbf16, #tpu.memory_space<vmem>>, %arg8: memref<1x1024xf32, #tpu.memory_space<vmem>>, %arg9: memref<16x1024xf32, #tpu.memory_space<vmem>>) attributes {dimension_semantics = [#tpu.dimension_semantics<parallel>], iteration_bounds = array<i64: 1>, scalar_prefetch = 1 : i64, scratch_operands = 0 : i64, tpu.core_type = #tpu.core_type<tc>, window_params = [{transform_indices = @transform_0, window_bounds = array<i64: 16, 128>}, {pipeline_mode = #tpu.pipeline_mode<synchronous>, transform_indices = @transform_1, window_bounds = array<i64: 128, 256>}, {pipeline_mode = #tpu.pipeline_mode<synchronous>, transform_indices = @transform_2, window_bounds = array<i64: 1, 256>}, {pipeline_mode = #tpu.pipeline_mode<synchronous>, transform_indices = @transform_3, window_bounds = array<i64: 256, 256>}, {pipeline_mode = #tpu.pipeline_mode<synchronous>, transform_indices = @transform_4, window_bounds = array<i64: 1, 256>}, {pipeline_mode = #tpu.pipeline_mode<synchronous>, transform_indices = @transform_5, window_bounds = array<i64: 256, 1024>}, {pipeline_mode = #tpu.pipeline_mode<synchronous>, transform_indices = @transform_6, window_bounds = array<i64: 1, 1024>}, {transform_indices = @transform_7, window_bounds = array<i64: 16, 1024>}]} {
    %c0 = arith.constant 0 : index
    %c0_0 = arith.constant 0 : index
    %0 = vector.load %arg2[%c0, %c0_0] : memref<16x128xf32, #tpu.memory_space<vmem>>, vector<16x128xf32>
    %1 = arith.truncf %0 : vector<16x128xf32> to vector<16x128xbf16>
    %c0_1 = arith.constant 0 : index
    %c0_2 = arith.constant 0 : index
    %2 = vector.load %arg3[%c0_1, %c0_2] : memref<128x256xbf16, #tpu.memory_space<vmem>>, vector<128x256xbf16>
    %cst = arith.constant dense<0.000000e+00> : vector<16x256xf32>
    %3 = tpu.matmul %1, %2, %cst {dimension_numbers = #tpu.dot_dimension_numbers<[1], [0], [0], [1], [0, 0, 1, 1], [], []>} : vector<16x128xbf16>, vector<128x256xbf16>, vector<16x256xf32> -> vector<16x256xf32>
    %c0_3 = arith.constant 0 : index
    %c0_4 = arith.constant 0 : index
    %4 = vector.load %arg4[%c0_3, %c0_4] : memref<1x256xf32, #tpu.memory_space<vmem>>, vector<1x256xf32>
    %5 = vector.broadcast %4 : vector<1x256xf32> to vector<16x256xf32>
    %6 = arith.addf %3, %5 : vector<16x256xf32>
    %cst_5 = arith.constant 0.000000e+00 : f32
    %7 = vector.broadcast %cst_5 : f32 to vector<16x256xf32>
    %8 = arith.maximumf %6, %7 : vector<16x256xf32>
    %9 = arith.truncf %8 : vector<16x256xf32> to vector<16x256xbf16>
    %c0_6 = arith.constant 0 : index
    %c0_7 = arith.constant 0 : index
    %10 = vector.load %arg5[%c0_6, %c0_7] : memref<256x256xbf16, #tpu.memory_space<vmem>>, vector<256x256xbf16>
    %cst_8 = arith.constant dense<0.000000e+00> : vector<16x256xf32>
    %11 = tpu.matmul %9, %10, %cst_8 {dimension_numbers = #tpu.dot_dimension_numbers<[1], [0], [0], [1], [0, 0, 1, 1], [], []>} : vector<16x256xbf16>, vector<256x256xbf16>, vector<16x256xf32> -> vector<16x256xf32>
    %c0_9 = arith.constant 0 : index
    %c0_10 = arith.constant 0 : index
    %12 = vector.load %arg6[%c0_9, %c0_10] : memref<1x256xf32, #tpu.memory_space<vmem>>, vector<1x256xf32>
    %13 = vector.broadcast %12 : vector<1x256xf32> to vector<16x256xf32>
    %14 = arith.addf %11, %13 : vector<16x256xf32>
    %cst_11 = arith.constant 0.000000e+00 : f32
    %15 = vector.broadcast %cst_11 : f32 to vector<16x256xf32>
    %16 = arith.maximumf %14, %15 : vector<16x256xf32>
    %17 = arith.truncf %16 : vector<16x256xf32> to vector<16x256xbf16>
    %c0_12 = arith.constant 0 : index
    %c0_13 = arith.constant 0 : index
    %18 = vector.load %arg7[%c0_12, %c0_13] : memref<256x1024xbf16, #tpu.memory_space<vmem>>, vector<256x1024xbf16>
    %cst_14 = arith.constant dense<0.000000e+00> : vector<16x1024xf32>
    %19 = tpu.matmul %17, %18, %cst_14 {dimension_numbers = #tpu.dot_dimension_numbers<[1], [0], [0], [1], [0, 0, 1, 1], [], []>} : vector<16x256xbf16>, vector<256x1024xbf16>, vector<16x1024xf32> -> vector<16x1024xf32>
    %c0_15 = arith.constant 0 : index
    %c0_16 = arith.constant 0 : index
    %20 = vector.load %arg8[%c0_15, %c0_16] : memref<1x1024xf32, #tpu.memory_space<vmem>>, vector<1x1024xf32>
    %21 = vector.broadcast %20 : vector<1x1024xf32> to vector<16x1024xf32>
    %22 = arith.addf %19, %21 : vector<16x1024xf32>
    %c0_17 = arith.constant 0 : index
    %c0_18 = arith.constant 0 : index
    %23 = vector.load %arg9[%c0_17, %c0_18] : memref<16x1024xf32, #tpu.memory_space<vmem>>, vector<16x1024xf32>
    tpu.vector_store %arg9[%c0_17, %c0_18], %22 {strides = array<i32>} : memref<16x1024xf32, #tpu.memory_space<vmem>>, vector<16x1024xf32>,
    return
  }
  func.func @transform_0(%arg0: i32, %arg1: memref<1xi32, #tpu.memory_space<smem>>) -> (i32, i32) {
    %c0_i32 = arith.constant 0 : i32
    %c0_i32_0 = arith.constant 0 : i32
    return %arg0, %c0_i32 : i32, i32
  }
  func.func @transform_1(%arg0: i32, %arg1: memref<1xi32, #tpu.memory_space<smem>>) -> (i32, i32) {
    %c0_i32 = arith.constant 0 : i32
    %c0_i32_0 = arith.constant 0 : i32
    %c0_i32_1 = arith.constant 0 : i32
    return %c0_i32, %c0_i32_0 : i32, i32
  }
  func.func @transform_2(%arg0: i32, %arg1: memref<1xi32, #tpu.memory_space<smem>>) -> (i32, i32) {
    %c0_i32 = arith.constant 0 : i32
    %c0_i32_0 = arith.constant 0 : i32
    %c0_i32_1 = arith.constant 0 : i32
    return %c0_i32, %c0_i32_0 : i32, i32
  }
  func.func @transform_3(%arg0: i32, %arg1: memref<1xi32, #tpu.memory_space<smem>>) -> (i32, i32) {
    %c0_i32 = arith.constant 0 : i32
    %c0_i32_0 = arith.constant 0 : i32
    %c0_i32_1 = arith.constant 0 : i32
    return %c0_i32, %c0_i32_0 : i32, i32
  }
  func.func @transform_4(%arg0: i32, %arg1: memref<1xi32, #tpu.memory_space<smem>>) -> (i32, i32) {
    %c0_i32 = arith.constant 0 : i32
    %c0_i32_0 = arith.constant 0 : i32
    %c0_i32_1 = arith.constant 0 : i32
    return %c0_i32, %c0_i32_0 : i32, i32
  }
  func.func @transform_5(%arg0: i32, %arg1: memref<1xi32, #tpu.memory_space<smem>>) -> (i32, i32) {
    %c0_i32 = arith.constant 0 : i32
    %c0_i32_0 = arith.constant 0 : i32
    %c0_i32_1 = arith.constant 0 : i32
    return %c0_i32, %c0_i32_0 : i32, i32
  }
  func.func @transform_6(%arg0: i32, %arg1: memref<1xi32, #tpu.memory_space<smem>>) -> (i32, i32) {
    %c0_i32 = arith.constant 0 : i32
    %c0_i32_0 = arith.constant 0 : i32
    %c0_i32_1 = arith.constant 0 : i32
    return %c0_i32, %c0_i32_0 : i32, i32
  }
  func.func @transform_7(%arg0: i32, %arg1: memref<1xi32, #tpu.memory_space<smem>>) -> (i32, i32) {
    %c0_i32 = arith.constant 0 : i32
    %c0_i32_0 = arith.constant 0 : i32
    return %arg0, %c0_i32 : i32, i32
  }
}

</mosaic_0001>

<llo_original>
// kernel: tpu_custom_call.1
$region0: #{tpu_custom_call.1}
  #allocation0 [shape = 'u32[]', space=smem, size = 0x4, offset = 0x4, fixed_abs, tag = 'smem constant byte address 0x4 - core index']
  #allocation1 [shape = 'u32[144,128]{1,0:T(1,128)}', space=vmem, size = 0x12000, scoped, tag = 'internal scratch']
  #allocation2 [shape = 's32[1]{0}', space=sflag, size = 0x4, scoped, tag = 'scoped memory for tpu_custom_call.1']
  #allocation3 [shape = 's32[1]{0:T(128)S(6)}', space=smem, size = 0x200, scoped, tag = 'prefetched SMEM operand 0']
  %s0 = inlined_call_operand.<no memory space> [shape: s32[1], index: 0, kind: input, shape index: {}]
  %s1 = inlined_call_operand.hbm [shape: f32[16,128], index: 1, kind: input, shape index: {}]
  %s2 = inlined_call_operand.hbm [shape: bf16[128,256], index: 2, kind: input, shape index: {}]
  %s3 = inlined_call_operand.vmem [shape: f32[1,256], index: 3, kind: input, shape index: {}]
  %s4 = inlined_call_operand.hbm [shape: bf16[256,256], index: 4, kind: input, shape index: {}]
  %s5 = inlined_call_operand.vmem [shape: f32[1,256], index: 5, kind: input, shape index: {}]
  %s6 = inlined_call_operand.hbm [shape: bf16[256,1024], index: 6, kind: input, shape index: {}]
  %s7 = inlined_call_operand.vmem [shape: f32[1,1024], index: 7, kind: input, shape index: {}]
  %s8 = inlined_call_operand.hbm [shape: f32[16,1024], index: 8, kind: output, shape index: {}]
  %s9 = sld [smem:[#allocation0]]
  $region54: #{tpu_custom_call.1} parent=0
    _
  %s11 = ssub.s32 1, %s9
  %s12 = scalar_select 0, %s11, %s9
  %13 = sst [smem:[#allocation3]] %s0
  $region1: #{tpu_custom_call.1} parent=0
    #allocation4 [shape = 'u8[8192]{0}', space=vmem, size = 0x2000, scoped, tag = 'input window, operand 1, single buffered']
    #allocation5 [shape = 's32[1]{0}', space=sflag, size = 0x4, scoped, tag = 'scoped memory for tpu_custom_call.1']
    #allocation6 [shape = 's32[1]{0}', space=sflag, size = 0x4, scoped, tag = 'scoped memory for tpu_custom_call.1']
    #allocation7 [shape = 'u8[65536]{0}', space=vmem, size = 0x10000, scoped, tag = 'input window, operand 2, single buffered']
    #allocation8 [shape = 's32[1]{0}', space=sflag, size = 0x4, scoped, tag = 'scoped memory for tpu_custom_call.1']
    #allocation9 [shape = 'u8[131072]{0}', space=vmem, size = 0x20000, scoped, tag = 'input window, operand 4, single buffered']
    #allocation10 [shape = 'u8[524288]{0}', space=vmem, size = 0x80000, scoped, tag = 'input window, operand 6, single buffered']
    #allocation11 [shape = 's32[1]{0}', space=sflag, size = 0x4, scoped, tag = 'scoped memory for tpu_custom_call.1']
    #allocation12 [shape = 'u8[65536]{0}', space=vmem, size = 0x10000, scoped, tag = 'output window, operand 0, single buffered']
    %14 = vsyncpa [#allocation5], 0
    %15 = vsyncpa [#allocation8], 0
    %16 = vsyncpa [#allocation11], 0
    %17 = vsyncpa [#allocation6], 0
    // Predicated region
    $region2: #{tpu_custom_call.1} parent=1 // pred_check
      _
    $region3: #{tpu_custom_call.1} parent=1 // pred_check_branch
      %19 = sbr.rel (0) target = $region5
    $region4: #{tpu_custom_call.1} parent=1 // pred_region
      %s21 = ssub.s32 256, 256
      %22 = vsyncadd [#allocation5], %s21
      %s23 = sshll.u32 [#allocation4], 4
      %s24 = int_to_ptr.vmem [resolvable:$true] %s23
      %29 = dma.hbm_to_vmem [thread:$0]  %s1, 256, %s24, [#allocation5], 128, 128, 8
    $region5: #{tpu_custom_call.1} parent=1 // pred_fallthru
      _
    // Predicated region
    $region6: #{tpu_custom_call.1} parent=1 // pred_check
      _
    $region7: #{tpu_custom_call.1} parent=1 // pred_check_branch
      %31 = sbr.rel (0) target = $region9
    $region8: #{tpu_custom_call.1} parent=1 // pred_region
      %s33 = ssub.s32 2048, 2048
      %34 = vsyncadd [#allocation8], %s33
      %s35 = sshll.u32 [#allocation7], 4
      %s36 = int_to_ptr.vmem [resolvable:$true] %s35
      %41 = dma.hbm_to_vmem [thread:$0]  %s2, 2048, %s36, [#allocation8], 128, 128, 8
    $region9: #{tpu_custom_call.1} parent=1 // pred_fallthru
      _
    // Predicated region
    $region10: #{tpu_custom_call.1} parent=1 // pred_check
      _
    $region11: #{tpu_custom_call.1} parent=1 // pred_check_branch
      %43 = sbr.rel (0) target = $region13
    $region12: #{tpu_custom_call.1} parent=1 // pred_region
      _
    $region13: #{tpu_custom_call.1} parent=1 // pred_fallthru
      _
    // Predicated region
    $region14: #{tpu_custom_call.1} parent=1 // pred_check
      _
    $region15: #{tpu_custom_call.1} parent=1 // pred_check_branch
      %45 = sbr.rel (0) target = $region17
    $region16: #{tpu_custom_call.1} parent=1 // pred_region
      %s47 = ssub.s32 4096, 4096
      %48 = vsyncadd [#allocation8], %s47
      %s49 = sshll.u32 [#allocation9], 4
      %s50 = int_to_ptr.vmem [resolvable:$true] %s49
      %55 = dma.hbm_to_vmem [thread:$0]  %s4, 4096, %s50, [#allocation8], 128, 128, 8
    $region17: #{tpu_custom_call.1} parent=1 // pred_fallthru
      _
    // Predicated region
    $region18: #{tpu_custom_call.1} parent=1 // pred_check
      _
    $region19: #{tpu_custom_call.1} parent=1 // pred_check_branch
      %57 = sbr.rel (0) target = $region21
    $region20: #{tpu_custom_call.1} parent=1 // pred_region
      _
    $region21: #{tpu_custom_call.1} parent=1 // pred_fallthru
      _
    // Predicated region
    $region22: #{tpu_custom_call.1} parent=1 // pred_check
      _
    $region23: #{tpu_custom_call.1} parent=1 // pred_check_branch
      %59 = sbr.rel (0) target = $region25
    $region24: #{tpu_custom_call.1} parent=1 // pred_region
      %s61 = ssub.s32 16384, 16384
      %62 = vsyncadd [#allocation11], %s61
      %s63 = sshll.u32 [#allocation10], 4
      %s64 = int_to_ptr.vmem [resolvable:$true] %s63
      %69 = dma.hbm_to_vmem [thread:$0]  %s6, 16384, %s64, [#allocation11], 512, 512, 32
    $region25: #{tpu_custom_call.1} parent=1 // pred_fallthru
      _
    // Predicated region
    $region26: #{tpu_custom_call.1} parent=1 // pred_check
      _
    $region27: #{tpu_custom_call.1} parent=1 // pred_check_branch
      %71 = sbr.rel (0) target = $region29
    $region28: #{tpu_custom_call.1} parent=1 // pred_region
      _
    $region29: #{tpu_custom_call.1} parent=1 // pred_fallthru
      _
    // Predicated region
    $region30: #{tpu_custom_call.1} parent=1 // pred_check
      _
    $region31: #{tpu_custom_call.1} parent=1 // pred_check_branch
      %73 = sbr.rel (0) target = $region33
    $region32: #{tpu_custom_call.1} parent=1 // pred_region
      %74 = dma.done [#allocation5], 256
    $region33: #{tpu_custom_call.1} parent=1 // pred_fallthru
      _
    // Predicated region
    $region34: #{tpu_custom_call.1} parent=1 // pred_check
      _
    $region35: #{tpu_custom_call.1} parent=1 // pred_check_branch
      %76 = sbr.rel (0) target = $region37
    $region36: #{tpu_custom_call.1} parent=1 // pred_region
      %77 = dma.done [#allocation8], 2048
    $region37: #{tpu_custom_call.1} parent=1 // pred_fallthru
      _
    // Predicated region
    $region38: #{tpu_custom_call.1} parent=1 // pred_check
      _
    $region39: #{tpu_custom_call.1} parent=1 // pred_check_branch
      %79 = sbr.rel (0) target = $region41
    $region40: #{tpu_custom_call.1} parent=1 // pred_region
      %80 = dma.done [#allocation8], 4096
    $region41: #{tpu_custom_call.1} parent=1 // pred_fallthru
      _
    // Predicated region
    $region42: #{tpu_custom_call.1} parent=1 // pred_check
      _
    $region43: #{tpu_custom_call.1} parent=1 // pred_check_branch
      %82 = sbr.rel (0) target = $region45
    $region44: #{tpu_custom_call.1} parent=1 // pred_region
      %83 = dma.done [#allocation11], 16384
    $region45: #{tpu_custom_call.1} parent=1 // pred_fallthru
      _
    %v85 = vld [vmem:[#allocation4] sm:$0xff]
    %v86 = vld [vmem:[#allocation4 + $0x8] sm:$0xff]
    %v87 = vpack.c.bf16 %v86, %v85
    %v88 = vld [vmem:[#allocation7] sm:$0xff]
    %v89 = vld [vmem:[#allocation7 + $0x8] sm:$0xff]
    %v90 = vld [vmem:[#allocation7 + $0x10] sm:$0xff]
    %v91 = vld [vmem:[#allocation7 + $0x18] sm:$0xff]
    %v92 = vld [vmem:[#allocation7 + $0x20] sm:$0xff]
    %v93 = vld [vmem:[#allocation7 + $0x28] sm:$0xff]
    %v94 = vld [vmem:[#allocation7 + $0x30] sm:$0xff]
    %v95 = vld [vmem:[#allocation7 + $0x38] sm:$0xff]
    %v96 = vld [vmem:[#allocation7 + $0x40] sm:$0xff]
    %v97 = vld [vmem:[#allocation7 + $0x48] sm:$0xff]
    %v98 = vld [vmem:[#allocation7 + $0x50] sm:$0xff]
    %v99 = vld [vmem:[#allocation7 + $0x58] sm:$0xff]
    %v100 = vld [vmem:[#allocation7 + $0x60] sm:$0xff]
    %v101 = vld [vmem:[#allocation7 + $0x68] sm:$0xff]
    %v102 = vld [vmem:[#allocation7 + $0x70] sm:$0xff]
    %v103 = vld [vmem:[#allocation7 + $0x78] sm:$0xff]
    %v104 = vld [vmem:[%s3] sm:$0x3]
    %v106 = vlaneseq
    %v107 = vshrl.u32 %v106, 7
    %v108 = vsub.s32 0, %v107
    %v109 = vrot.slane %v104, %v108
    %v110 = vlaneseq
    %v111 = vshrl.u32 %v110, 7
    %v112 = vsub.s32 1, %v111
    %v113 = vrot.slane %v104, %v112
    %v132 = vunpack.c.l.b16 %v88
    %v133 = vunpack.c.h.b16 %v88
    %v134 = vunpack.c.l.b16 %v89
    %v135 = vunpack.c.h.b16 %v89
    %v136 = vunpack.c.l.b16 %v90
    %v137 = vunpack.c.h.b16 %v90
    %v138 = vunpack.c.l.b16 %v91
    %v139 = vunpack.c.h.b16 %v91
    %v140 = vunpack.c.l.b16 %v92
    %v141 = vunpack.c.h.b16 %v92
    %v142 = vunpack.c.l.b16 %v93
    %v143 = vunpack.c.h.b16 %v93
    %v144 = vunpack.c.l.b16 %v94
    %v145 = vunpack.c.h.b16 %v94
    %v146 = vunpack.c.l.b16 %v95
    %v147 = vunpack.c.h.b16 %v95
    %v148 = vunpack.c.l.b16 %v96
    %v149 = vunpack.c.h.b16 %v96
    %v150 = vunpack.c.l.b16 %v97
    %v151 = vunpack.c.h.b16 %v97
    %v152 = vunpack.c.l.b16 %v98
    %v153 = vunpack.c.h.b16 %v98
    %v154 = vunpack.c.l.b16 %v99
    %v155 = vunpack.c.h.b16 %v99
    %v156 = vunpack.c.l.b16 %v100
    %v157 = vunpack.c.h.b16 %v100
    %v158 = vunpack.c.l.b16 %v101
    %v159 = vunpack.c.h.b16 %v101
    %v160 = vunpack.c.l.b16 %v102
    %v161 = vunpack.c.h.b16 %v102
    %v162 = vunpack.c.l.b16 %v103
    %v163 = vunpack.c.h.b16 %v103
    %v164 = vpack.c.b16 %v134, %v132
    %v165 = vpack.c.b16 %v135, %v133
    %v166 = vpack.c.b16 %v138, %v136
    %v167 = vpack.c.b16 %v139, %v137
    %v168 = vpack.c.b16 %v142, %v140
    %v169 = vpack.c.b16 %v143, %v141
    %v170 = vpack.c.b16 %v146, %v144
    %v171 = vpack.c.b16 %v147, %v145
    %v172 = vpack.c.b16 %v150, %v148
    %v173 = vpack.c.b16 %v151, %v149
    %v174 = vpack.c.b16 %v154, %v152
    %v175 = vpack.c.b16 %v155, %v153
    %v176 = vpack.c.b16 %v158, %v156
    %v177 = vpack.c.b16 %v159, %v157
    %v178 = vpack.c.b16 %v162, %v160
    %v179 = vpack.c.b16 %v163, %v161
    %196 = vmatprep.subr.bf16.mxu0 %v179
    %197 = vmatpush1.bf16.msra.mxu0 %v178
    %198 = vmatprep.subr.bf16.mxu0 %v177
    %199 = vmatpush1.bf16.msra.mxu0 %v176
    %200 = vmatprep.subr.bf16.mxu0 %v175
    %201 = vmatpush1.bf16.msra.mxu0 %v174
    %202 = vmatprep.subr.bf16.mxu0 %v173
    %203 = vmatpush1.bf16.msra.mxu0 %v172
    %204 = vmatprep.subr.bf16.mxu0 %v171
    %205 = vmatpush1.bf16.msra.mxu0 %v170
    %206 = vmatprep.subr.bf16.mxu0 %v169
    %207 = vmatpush1.bf16.msra.mxu0 %v168
    %208 = vmatprep.subr.bf16.mxu0 %v167
    %209 = vmatpush1.bf16.msra.mxu0 %v166
    %210 = vmatprep.subr.bf16.mxu0 %v165
    %211 = vmatpush1.bf16.msra.mxu0 %v164
    %212 = vmatprep.subr.bf16.mxu0 0
    %213 = vmatpush2.bf16.msra.mxu0 0
    %214 = vmatprep.subr.bf16.mxu0 0
    %215 = vmatpush2.bf16.msra.mxu0 0
    %216 = vmatprep.subr.bf16.mxu0 0
    %217 = vmatpush2.bf16.msra.mxu0 0
    %218 = vmatprep.subr.bf16.mxu0 0
    %219 = vmatpush2.bf16.msra.mxu0 0
    %220 = vmatprep.subr.bf16.mxu0 0
    %221 = vmatpush2.bf16.msra.mxu0 0
    %222 = vmatprep.subr.bf16.mxu0 0
    %223 = vmatpush2.bf16.msra.mxu0 0
    %224 = vmatprep.subr.bf16.mxu0 0
    %225 = vmatpush2.bf16.msra.mxu0 0
    %226 = vmatprep.subr.bf16.mxu0 0
    %227 = vmatpush2.bf16.msra.mxu0 0
    %228 = vmatprep.mubr.bf16.mxu0 0
    %229 = vmatmul.mubr.bf16.gmra.mxu0 %v87
    %v230 = vpop.f32.mrf.mxu0
    %v231 = vadd.f32 %v109, %v230
    %v232 = vpop.f32.mrf.mxu0
    %v233 = vadd.f32 %v113, %v232
    %v234 = vpop.f32.mrf.mxu0
    %v235 = vadd.f32 %v109, %v234
    %v236 = vpop.f32.mrf.mxu0
    %v237 = vadd.f32 %v113, %v236
    %238 = vdwg.mxu0
    %v239 = vmax.f32 %v231, 0.0
    %v240 = vmax.f32 %v233, 0.0
    %v241 = vmax.f32 %v235, 0.0
    %v242 = vmax.f32 %v237, 0.0
    %v243 = vpack.c.bf16 %v241, %v239
    %v244 = vpack.c.bf16 %v242, %v240
    %v245 = vld [vmem:[#allocation9] sm:$0xff]
    %v246 = vld [vmem:[#allocation9 + $0x8] sm:$0xff]
    %v247 = vld [vmem:[#allocation9 + $0x10] sm:$0xff]
    %v248 = vld [vmem:[#allocation9 + $0x18] sm:$0xff]
    %v249 = vld [vmem:[#allocation9 + $0x20] sm:$0xff]
    %v250 = vld [vmem:[#allocation9 + $0x28] sm:$0xff]
    %v251 = vld [vmem:[#allocation9 + $0x30] sm:$0xff]
    %v252 = vld [vmem:[#allocation9 + $0x38] sm:$0xff]
    %v253 = vld [vmem:[#allocation9 + $0x40] sm:$0xff]
    %v254 = vld [vmem:[#allocation9 + $0x48] sm:$0xff]
    %v255 = vld [vmem:[#allocation9 + $0x50] sm:$0xff]
    %v256 = vld [vmem:[#allocation9 + $0x58] sm:$0xff]
    %v257 = vld [vmem:[#allocation9 + $0x60] sm:$0xff]
    %v258 = vld [vmem:[#allocation9 + $0x68] sm:$0xff]
    %v259 = vld [vmem:[#allocation9 + $0x70] sm:$0xff]
    %v260 = vld [vmem:[#allocation9 + $0x78] sm:$0xff]
    %v261 = vld [vmem:[#allocation9 + $0x80] sm:$0xff]
    %v262 = vld [vmem:[#allocation9 + $0x88] sm:$0xff]
    %v263 = vld [vmem:[#allocation9 + $0x90] sm:$0xff]
    %v264 = vld [vmem:[#allocation9 + $0x98] sm:$0xff]
    %v265 = vld [vmem:[#allocation9 + $0xa0] sm:$0xff]
    %v266 = vld [vmem:[#allocation9 + $0xa8] sm:$0xff]
    %v267 = vld [vmem:[#allocation9 + $0xb0] sm:$0xff]
    %v268 = vld [vmem:[#allocation9 + $0xb8] sm:$0xff]
    %v269 = vld [vmem:[#allocation9 + $0xc0] sm:$0xff]
    %v270 = vld [vmem:[#allocation9 + $0xc8] sm:$0xff]
    %v271 = vld [vmem:[#allocation9 + $0xd0] sm:$0xff]
    %v272 = vld [vmem:[#allocation9 + $0xd8] sm:$0xff]
    %v273 = vld [vmem:[#allocation9 + $0xe0] sm:$0xff]
    %v274 = vld [vmem:[#allocation9 + $0xe8] sm:$0xff]
    %v275 = vld [vmem:[#allocation9 + $0xf0] sm:$0xff]
    %v276 = vld [vmem:[#allocation9 + $0xf8] sm:$0xff]
    %v277 = vld [vmem:[%s5] sm:$0x3]
    %v279 = vlaneseq
    %v280 = vshrl.u32 %v279, 7
    %v281 = vsub.s32 0, %v280
    %v282 = vrot.slane %v277, %v281
    %v283 = vlaneseq
    %v284 = vshrl.u32 %v283, 7
    %v285 = vsub.s32 1, %v284
    %v286 = vrot.slane %v277, %v285
    %v321 = vunpack.c.l.b16 %v245
    %v322 = vunpack.c.h.b16 %v245
    %v323 = vunpack.c.l.b16 %v246
    %v324 = vunpack.c.h.b16 %v246
    %v325 = vunpack.c.l.b16 %v247
    %v326 = vunpack.c.h.b16 %v247
    %v327 = vunpack.c.l.b16 %v248
    %v328 = vunpack.c.h.b16 %v248
    %v329 = vunpack.c.l.b16 %v249
    %v330 = vunpack.c.h.b16 %v249
    %v331 = vunpack.c.l.b16 %v250
    %v332 = vunpack.c.h.b16 %v250
    %v333 = vunpack.c.l.b16 %v251
    %v334 = vunpack.c.h.b16 %v251
    %v335 = vunpack.c.l.b16 %v252
    %v336 = vunpack.c.h.b16 %v252
    %v337 = vunpack.c.l.b16 %v253
    %v338 = vunpack.c.h.b16 %v253
    %v339 = vunpack.c.l.b16 %v254
    %v340 = vunpack.c.h.b16 %v254
    %v341 = vunpack.c.l.b16 %v255
    %v342 = vunpack.c.h.b16 %v255
    %v343 = vunpack.c.l.b16 %v256
    %v344 = vunpack.c.h.b16 %v256
    %v345 = vunpack.c.l.b16 %v257
    %v346 = vunpack.c.h.b16 %v257
    %v347 = vunpack.c.l.b16 %v258
    %v348 = vunpack.c.h.b16 %v258
    %v349 = vunpack.c.l.b16 %v259
    %v350 = vunpack.c.h.b16 %v259
    %v351 = vunpack.c.l.b16 %v260
    %v352 = vunpack.c.h.b16 %v260
    %v353 = vunpack.c.l.b16 %v261
    %v354 = vunpack.c.h.b16 %v261
    %v355 = vunpack.c.l.b16 %v262
    %v356 = vunpack.c.h.b16 %v262
    %v357 = vunpack.c.l.b16 %v263
    %v358 = vunpack.c.h.b16 %v263
    %v359 = vunpack.c.l.b16 %v264
    %v360 = vunpack.c.h.b16 %v264
    %v361 = vunpack.c.l.b16 %v265
    %v362 = vunpack.c.h.b16 %v265
    %v363 = vunpack.c.l.b16 %v266
    %v364 = vunpack.c.h.b16 %v266
    %v365 = vunpack.c.l.b16 %v267
    %v366 = vunpack.c.h.b16 %v267
    %v367 = vunpack.c.l.b16 %v268
    %v368 = vunpack.c.h.b16 %v268
    %v369 = vunpack.c.l.b16 %v269
    %v370 = vunpack.c.h.b16 %v269
    %v371 = vunpack.c.l.b16 %v270
    %v372 = vunpack.c.h.b16 %v270
    %v373 = vunpack.c.l.b16 %v271
    %v374 = vunpack.c.h.b16 %v271
    %v375 = vunpack.c.l.b16 %v272
    %v376 = vunpack.c.h.b16 %v272
    %v377 = vunpack.c.l.b16 %v273
    %v378 = vunpack.c.h.b16 %v273
    %v379 = vunpack.c.l.b16 %v274
    %v380 = vunpack.c.h.b16 %v274
    %v381 = vunpack.c.l.b16 %v275
    %v382 = vunpack.c.h.b16 %v275
    %v383 = vunpack.c.l.b16 %v276
    %v384 = vunpack.c.h.b16 %v276
    %v385 = vpack.c.b16 %v323, %v321
    %v386 = vpack.c.b16 %v324, %v322
    %v387 = vpack.c.b16 %v327, %v325
    %v388 = vpack.c.b16 %v328, %v326
    %v389 = vpack.c.b16 %v331, %v329
    %v390 = vpack.c.b16 %v332, %v330
    %v391 = vpack.c.b16 %v335, %v333
    %v392 = vpack.c.b16 %v336, %v334
    %v393 = vpack.c.b16 %v339, %v337
    %v394 = vpack.c.b16 %v340, %v338
    %v395 = vpack.c.b16 %v343, %v341
    %v396 = vpack.c.b16 %v344, %v342
    %v397 = vpack.c.b16 %v347, %v345
    %v398 = vpack.c.b16 %v348, %v346
    %v399 = vpack.c.b16 %v351, %v349
    %v400 = vpack.c.b16 %v352, %v350
    %v401 = vpack.c.b16 %v355, %v353
    %v402 = vpack.c.b16 %v356, %v354
    %v403 = vpack.c.b16 %v359, %v357
    %v404 = vpack.c.b16 %v360, %v358
    %v405 = vpack.c.b16 %v363, %v361
    %v406 = vpack.c.b16 %v364, %v362
    %v407 = vpack.c.b16 %v367, %v365
    %v408 = vpack.c.b16 %v368, %v366
    %v409 = vpack.c.b16 %v371, %v369
    %v410 = vpack.c.b16 %v372, %v370
    %v411 = vpack.c.b16 %v375, %v373
    %v412 = vpack.c.b16 %v376, %v374
    %v413 = vpack.c.b16 %v379, %v377
    %v414 = vpack.c.b16 %v380, %v378
    %v415 = vpack.c.b16 %v383, %v381
    %v416 = vpack.c.b16 %v384, %v382
    %449 = vmatprep.subr.bf16.mxu0 %v400
    %450 = vmatpush1.bf16.msra.mxu0 %v399
    %451 = vmatprep.subr.bf16.mxu0 %v398
    %452 = vmatpush1.bf16.msra.mxu0 %v397
    %453 = vmatprep.subr.bf16.mxu0 %v396
    %454 = vmatpush1.bf16.msra.mxu0 %v395
    %455 = vmatprep.subr.bf16.mxu0 %v394
    %456 = vmatpush1.bf16.msra.mxu0 %v393
    %457 = vmatprep.subr.bf16.mxu0 %v392
    %458 = vmatpush1.bf16.msra.mxu0 %v391
    %459 = vmatprep.subr.bf16.mxu0 %v390
    %460 = vmatpush1.bf16.msra.mxu0 %v389
    %461 = vmatprep.subr.bf16.mxu0 %v388
    %462 = vmatpush1.bf16.msra.mxu0 %v387
    %463 = vmatprep.subr.bf16.mxu0 %v386
    %464 = vmatpush1.bf16.msra.mxu0 %v385
    %465 = vmatprep.subr.bf16.mxu0 %v416
    %466 = vmatpush2.bf16.msra.mxu0 %v415
    %467 = vmatprep.subr.bf16.mxu0 %v414
    %468 = vmatpush2.bf16.msra.mxu0 %v413
    %469 = vmatprep.subr.bf16.mxu0 %v412
    %470 = vmatpush2.bf16.msra.mxu0 %v411
    %471 = vmatprep.subr.bf16.mxu0 %v410
    %472 = vmatpush2.bf16.msra.mxu0 %v409
    %473 = vmatprep.subr.bf16.mxu0 %v408
    %474 = vmatpush2.bf16.msra.mxu0 %v407
    %475 = vmatprep.subr.bf16.mxu0 %v406
    %476 = vmatpush2.bf16.msra.mxu0 %v405
    %477 = vmatprep.subr.bf16.mxu0 %v404
    %478 = vmatpush2.bf16.msra.mxu0 %v403
    %479 = vmatprep.subr.bf16.mxu0 %v402
    %480 = vmatpush2.bf16.msra.mxu0 %v401
    %481 = vmatprep.mubr.bf16.mxu0 %v244
    %482 = vmatmul.mubr.bf16.gmra.mxu0 %v243
    %v483 = vpop.f32.mrf.mxu0
    %v484 = vadd.f32 %v282, %v483
    %v485 = vpop.f32.mrf.mxu0
    %v486 = vadd.f32 %v286, %v485
    %v487 = vpop.f32.mrf.mxu0
    %v488 = vadd.f32 %v282, %v487
    %v489 = vpop.f32.mrf.mxu0
    %v490 = vadd.f32 %v286, %v489
    %491 = vdwg.mxu0
    %v492 = vmax.f32 %v484, 0.0
    %v493 = vmax.f32 %v486, 0.0
    %v494 = vmax.f32 %v488, 0.0
    %v495 = vmax.f32 %v490, 0.0
    %v496 = vpack.c.bf16 %v494, %v492
    %v497 = vpack.c.bf16 %v495, %v493
    %v498 = vld [vmem:[#allocation10] sm:$0xff]
    %v499 = vld [vmem:[#allocation10 + $0x8] sm:$0xff]
    %v500 = vld [vmem:[#allocation10 + $0x10] sm:$0xff]
    %v501 = vld [vmem:[#allocation10 + $0x18] sm:$0xff]
    %v502 = vld [vmem:[#allocation10 + $0x20] sm:$0xff]
    %v503 = vld [vmem:[#allocation10 + $0x28] sm:$0xff]
    %v504 = vld [vmem:[#allocation10 + $0x30] sm:$0xff]
    %v505 = vld [vmem:[#allocation10 + $0x38] sm:$0xff]
    %v506 = vld [vmem:[#allocation10 + $0x40] sm:$0xff]
    %v507 = vld [vmem:[#allocation10 + $0x48] sm:$0xff]
    %v508 = vld [vmem:[#allocation10 + $0x50] sm:$0xff]
    %v509 = vld [vmem:[#allocation10 + $0x58] sm:$0xff]
    %v510 = vld [vmem:[#allocation10 + $0x60] sm:$0xff]
    %v511 = vld [vmem:[#allocation10 + $0x68] sm:$0xff]
    %v512 = vld [vmem:[#allocation10 + $0x70] sm:$0xff]
    %v513 = vld [vmem:[#allocation10 + $0x78] sm:$0xff]
    %v514 = vld [vmem:[#allocation10 + $0x80] sm:$0xff]
    %v515 = vld [vmem:[#allocation10 + $0x88] sm:$0xff]
    %v516 = vld [vmem:[#allocation10 + $0x90] sm:$0xff]
    %v517 = vld [vmem:[#allocation10 + $0x98] sm:$0xff]
    %v518 = vld [vmem:[#allocation10 + $0xa0] sm:$0xff]
    %v519 = vld [vmem:[#allocation10 + $0xa8] sm:$0xff]
    %v520 = vld [vmem:[#allocation10 + $0xb0] sm:$0xff]
    %v521 = vld [vmem:[#allocation10 + $0xb8] sm:$0xff]
    %v522 = vld [vmem:[#allocation10 + $0xc0] sm:$0xff]
    %v523 = vld [vmem:[#allocation10 + $0xc8] sm:$0xff]
    %v524 = vld [vmem:[#allocation10 + $0xd0] sm:$0xff]
    %v525 = vld [vmem:[#allocation10 + $0xd8] sm:$0xff]
    %v526 = vld [vmem:[#allocation10 + $0xe0] sm:$0xff]
    %v527 = vld [vmem:[#allocation10 + $0xe8] sm:$0xff]
    %v528 = vld [vmem:[#allocation10 + $0xf0] sm:$0xff]
    %v529 = vld [vmem:[#allocation10 + $0xf8] sm:$0xff]
    %v530 = vld [vmem:[#allocation10 + $0x100] sm:$0xff]
    %v531 = vld [vmem:[#allocation10 + $0x108] sm:$0xff]
    %v532 = vld [vmem:[#allocation10 + $0x110] sm:$0xff]
    %v533 = vld [vmem:[#allocation10 + $0x118] sm:$0xff]
    %v534 = vld [vmem:[#allocation10 + $0x120] sm:$0xff]
    %v535 = vld [vmem:[#allocation10 + $0x128] sm:$0xff]
    %v536 = vld [vmem:[#allocation10 + $0x130] sm:$0xff]
    %v537 = vld [vmem:[#allocation10 + $0x138] sm:$0xff]
    %v538 = vld [vmem:[#allocation10 + $0x140] sm:$0xff]
    %v539 = vld [vmem:[#allocation10 + $0x148] sm:$0xff]
    %v540 = vld [vmem:[#allocation10 + $0x150] sm:$0xff]
    %v541 = vld [vmem:[#allocation10 + $0x158] sm:$0xff]
    %v542 = vld [vmem:[#allocation10 + $0x160] sm:$0xff]
    %v543 = vld [vmem:[#allocation10 + $0x168] sm:$0xff]
    %v544 = vld [vmem:[#allocation10 + $0x170] sm:$0xff]
    %v545 = vld [vmem:[#allocation10 + $0x178] sm:$0xff]
    %v546 = vld [vmem:[#allocation10 + $0x180] sm:$0xff]
    %v547 = vld [vmem:[#allocation10 + $0x188] sm:$0xff]
    %v548 = vld [vmem:[#allocation10 + $0x190] sm:$0xff]
    %v549 = vld [vmem:[#allocation10 + $0x198] sm:$0xff]
    %v550 = vld [vmem:[#allocation10 + $0x1a0] sm:$0xff]
    %v551 = vld [vmem:[#allocation10 + $0x1a8] sm:$0xff]
    %v552 = vld [vmem:[#allocation10 + $0x1b0] sm:$0xff]
    %v553 = vld [vmem:[#allocation10 + $0x1b8] sm:$0xff]
    %v554 = vld [vmem:[#allocation10 + $0x1c0] sm:$0xff]
    %v555 = vld [vmem:[#allocation10 + $0x1c8] sm:$0xff]
    %v556 = vld [vmem:[#allocation10 + $0x1d0] sm:$0xff]
    %v557 = vld [vmem:[#allocation10 + $0x1d8] sm:$0xff]
    %v558 = vld [vmem:[#allocation10 + $0x1e0] sm:$0xff]
    %v559 = vld [vmem:[#allocation10 + $0x1e8] sm:$0xff]
    %v560 = vld [vmem:[#allocation10 + $0x1f0] sm:$0xff]
    %v561 = vld [vmem:[#allocation10 + $0x1f8] sm:$0xff]
    %v562 = vld [vmem:[#allocation10 + $0x200] sm:$0xff]
    %v563 = vld [vmem:[#allocation10 + $0x208] sm:$0xff]
    %v564 = vld [vmem:[#allocation10 + $0x210] sm:$0xff]
    %v565 = vld [vmem:[#allocation10 + $0x218] sm:$0xff]
    %v566 = vld [vmem:[#allocation10 + $0x220] sm:$0xff]
    %v567 = vld [vmem:[#allocation10 + $0x228] sm:$0xff]
    %v568 = vld [vmem:[#allocation10 + $0x230] sm:$0xff]
    %v569 = vld [vmem:[#allocation10 + $0x238] sm:$0xff]
    %v570 = vld [vmem:[#allocation10 + $0x240] sm:$0xff]
    %v571 = vld [vmem:[#allocation10 + $0x248] sm:$0xff]
    %v572 = vld [vmem:[#allocation10 + $0x250] sm:$0xff]
    %v573 = vld [vmem:[#allocation10 + $0x258] sm:$0xff]
    %v574 = vld [vmem:[#allocation10 + $0x260] sm:$0xff]
    %v575 = vld [vmem:[#allocation10 + $0x268] sm:$0xff]
    %v576 = vld [vmem:[#allocation10 + $0x270] sm:$0xff]
    %v577 = vld [vmem:[#allocation10 + $0x278] sm:$0xff]
    %v578 = vld [vmem:[#allocation10 + $0x280] sm:$0xff]
    %v579 = vld [vmem:[#allocation10 + $0x288] sm:$0xff]
    %v580 = vld [vmem:[#allocation10 + $0x290] sm:$0xff]
    %v581 = vld [vmem:[#allocation10 + $0x298] sm:$0xff]
    %v582 = vld [vmem:[#allocation10 + $0x2a0] sm:$0xff]
    %v583 = vld [vmem:[#allocation10 + $0x2a8] sm:$0xff]
    %v584 = vld [vmem:[#allocation10 + $0x2b0] sm:$0xff]
    %v585 = vld [vmem:[#allocation10 + $0x2b8] sm:$0xff]
    %v586 = vld [vmem:[#allocation10 + $0x2c0] sm:$0xff]
    %v587 = vld [vmem:[#allocation10 + $0x2c8] sm:$0xff]
    %v588 = vld [vmem:[#allocation10 + $0x2d0] sm:$0xff]
    %v589 = vld [vmem:[#allocation10 + $0x2d8] sm:$0xff]
    %v590 = vld [vmem:[#allocation10 + $0x2e0] sm:$0xff]
    %v591 = vld [vmem:[#allocation10 + $0x2e8] sm:$0xff]
    %v592 = vld [vmem:[#allocation10 + $0x2f0] sm:$0xff]
    %v593 = vld [vmem:[#allocation10 + $0x2f8] sm:$0xff]
    %v594 = vld [vmem:[#allocation10 + $0x300] sm:$0xff]
    %v595 = vld [vmem:[#allocation10 + $0x308] sm:$0xff]
    %v596 = vld [vmem:[#allocation10 + $0x310] sm:$0xff]
    %v597 = vld [vmem:[#allocation10 + $0x318] sm:$0xff]
    %v598 = vld [vmem:[#allocation10 + $0x320] sm:$0xff]
    %v599 = vld [vmem:[#allocation10 + $0x328] sm:$0xff]
    %v600 = vld [vmem:[#allocation10 + $0x330] sm:$0xff]
    %v601 = vld [vmem:[#allocation10 + $0x338] sm:$0xff]
    %v602 = vld [vmem:[#allocation10 + $0x340] sm:$0xff]
    %v603 = vld [vmem:[#allocation10 + $0x348] sm:$0xff]
    %v604 = vld [vmem:[#allocation10 + $0x350] sm:$0xff]
    %v605 = vld [vmem:[#allocation10 + $0x358] sm:$0xff]
    %v606 = vld [vmem:[#allocation10 + $0x360] sm:$0xff]
    %v607 = vld [vmem:[#allocation10 + $0x368] sm:$0xff]
    %v608 = vld [vmem:[#allocation10 + $0x370] sm:$0xff]
    %v609 = vld [vmem:[#allocation10 + $0x378] sm:$0xff]
    %v610 = vld [vmem:[#allocation10 + $0x380] sm:$0xff]
    %v611 = vld [vmem:[#allocation10 + $0x388] sm:$0xff]
    %v612 = vld [vmem:[#allocation10 + $0x390] sm:$0xff]
    %v613 = vld [vmem:[#allocation10 + $0x398] sm:$0xff]
    %v614 = vld [vmem:[#allocation10 + $0x3a0] sm:$0xff]
    %v615 = vld [vmem:[#allocation10 + $0x3a8] sm:$0xff]
    %v616 = vld [vmem:[#allocation10 + $0x3b0] sm:$0xff]
    %v617 = vld [vmem:[#allocation10 + $0x3b8] sm:$0xff]
    %v618 = vld [vmem:[#allocation10 + $0x3c0] sm:$0xff]
    %v619 = vld [vmem:[#allocation10 + $0x3c8] sm:$0xff]
    %v620 = vld [vmem:[#allocation10 + $0x3d0] sm:$0xff]
    %v621 = vld [vmem:[#allocation10 + $0x3d8] sm:$0xff]
    %v622 = vld [vmem:[#allocation10 + $0x3e0] sm:$0xff]
    %v623 = vld [vmem:[#allocation10 + $0x3e8] sm:$0xff]
    %v624 = vld [vmem:[#allocation10 + $0x3f0] sm:$0xff]
    %v625 = vld [vmem:[#allocation10 + $0x3f8] sm:$0xff]
    %v626 = vld [vmem:[%s7] sm:$0xff]
    %v628 = vlaneseq
    %v629 = vshrl.u32 %v628, 7
    %v630 = vsub.s32 0, %v629
    %v631 = vrot.slane %v626, %v630
    %v632 = vlaneseq
    %v633 = vshrl.u32 %v632, 7
    %v634 = vsub.s32 1, %v633
    %v635 = vrot.slane %v626, %v634
    %v636 = vlaneseq
    %v637 = vshrl.u32 %v636, 7
    %v638 = vsub.s32 2, %v637
    %v639 = vrot.slane %v626, %v638
    %v640 = vlaneseq
    %v641 = vshrl.u32 %v640, 7
    %v642 = vsub.s32 3, %v641
    %v643 = vrot.slane %v626, %v642
    %v644 = vlaneseq
    %v645 = vshrl.u32 %v644, 7
    %v646 = vsub.s32 4, %v645
    %v647 = vrot.slane %v626, %v646
    %v648 = vlaneseq
    %v649 = vshrl.u32 %v648, 7
    %v650 = vsub.s32 5, %v649
    %v651 = vrot.slane %v626, %v650
    %v652 = vlaneseq
    %v653 = vshrl.u32 %v652, 7
    %v654 = vsub.s32 6, %v653
    %v655 = vrot.slane %v626, %v654
    %v656 = vlaneseq
    %v657 = vshrl.u32 %v656, 7
    %v658 = vsub.s32 7, %v657
    %v659 = vrot.slane %v626, %v658
    %v796 = vunpack.c.l.b16 %v498
    %v797 = vunpack.c.h.b16 %v498
    %v798 = vunpack.c.l.b16 %v499
    %v799 = vunpack.c.h.b16 %v499
    %v800 = vunpack.c.l.b16 %v500
    %v801 = vunpack.c.h.b16 %v500
    %v802 = vunpack.c.l.b16 %v501
    %v803 = vunpack.c.h.b16 %v501
    %v804 = vunpack.c.l.b16 %v502
    %v805 = vunpack.c.h.b16 %v502
    %v806 = vunpack.c.l.b16 %v503
    %v807 = vunpack.c.h.b16 %v503
    %v808 = vunpack.c.l.b16 %v504
    %v809 = vunpack.c.h.b16 %v504
    %v810 = vunpack.c.l.b16 %v505
    %v811 = vunpack.c.h.b16 %v505
    %v812 = vunpack.c.l.b16 %v506
    %v813 = vunpack.c.h.b16 %v506
    %v814 = vunpack.c.l.b16 %v507
    %v815 = vunpack.c.h.b16 %v507
    %v816 = vunpack.c.l.b16 %v508
    %v817 = vunpack.c.h.b16 %v508
    %v818 = vunpack.c.l.b16 %v509
    %v819 = vunpack.c.h.b16 %v509
    %v820 = vunpack.c.l.b16 %v510
    %v821 = vunpack.c.h.b16 %v510
    %v822 = vunpack.c.l.b16 %v511
    %v823 = vunpack.c.h.b16 %v511
    %v824 = vunpack.c.l.b16 %v512
    %v825 = vunpack.c.h.b16 %v512
    %v826 = vunpack.c.l.b16 %v513
    %v827 = vunpack.c.h.b16 %v513
    %v828 = vunpack.c.l.b16 %v514
    %v829 = vunpack.c.h.b16 %v514
    %v830 = vunpack.c.l.b16 %v515
    %v831 = vunpack.c.h.b16 %v515
    %v832 = vunpack.c.l.b16 %v516
    %v833 = vunpack.c.h.b16 %v516
    %v834 = vunpack.c.l.b16 %v517
    %v835 = vunpack.c.h.b16 %v517
    %v836 = vunpack.c.l.b16 %v518
    %v837 = vunpack.c.h.b16 %v518
    %v838 = vunpack.c.l.b16 %v519
    %v839 = vunpack.c.h.b16 %v519
    %v840 = vunpack.c.l.b16 %v520
    %v841 = vunpack.c.h.b16 %v520
    %v842 = vunpack.c.l.b16 %v521
    %v843 = vunpack.c.h.b16 %v521
    %v844 = vunpack.c.l.b16 %v522
    %v845 = vunpack.c.h.b16 %v522
    %v846 = vunpack.c.l.b16 %v523
    %v847 = vunpack.c.h.b16 %v523
    %v848 = vunpack.c.l.b16 %v524
    %v849 = vunpack.c.h.b16 %v524
    %v850 = vunpack.c.l.b16 %v525
    %v851 = vunpack.c.h.b16 %v525
    %v852 = vunpack.c.l.b16 %v526
    %v853 = vunpack.c.h.b16 %v526
    %v854 = vunpack.c.l.b16 %v527
    %v855 = vunpack.c.h.b16 %v527
    %v856 = vunpack.c.l.b16 %v528
    %v857 = vunpack.c.h.b16 %v528
    %v858 = vunpack.c.l.b16 %v529
    %v859 = vunpack.c.h.b16 %v529
    %v860 = vunpack.c.l.b16 %v530
    %v861 = vunpack.c.h.b16 %v530
    %v862 = vunpack.c.l.b16 %v531
    %v863 = vunpack.c.h.b16 %v531
    %v864 = vunpack.c.l.b16 %v532
    %v865 = vunpack.c.h.b16 %v532
    %v866 = vunpack.c.l.b16 %v533
    %v867 = vunpack.c.h.b16 %v533
    %v868 = vunpack.c.l.b16 %v534
    %v869 = vunpack.c.h.b16 %v534
    %v870 = vunpack.c.l.b16 %v535
    %v871 = vunpack.c.h.b16 %v535
    %v872 = vunpack.c.l.b16 %v536
    %v873 = vunpack.c.h.b16 %v536
    %v874 = vunpack.c.l.b16 %v537
    %v875 = vunpack.c.h.b16 %v537
    %v876 = vunpack.c.l.b16 %v538
    %v877 = vunpack.c.h.b16 %v538
    %v878 = vunpack.c.l.b16 %v539
    %v879 = vunpack.c.h.b16 %v539
    %v880 = vunpack.c.l.b16 %v540
    %v881 = vunpack.c.h.b16 %v540
    %v882 = vunpack.c.l.b16 %v541
    %v883 = vunpack.c.h.b16 %v541
    %v884 = vunpack.c.l.b16 %v542
    %v885 = vunpack.c.h.b16 %v542
    %v886 = vunpack.c.l.b16 %v543
    %v887 = vunpack.c.h.b16 %v543
    %v888 = vunpack.c.l.b16 %v544
    %v889 = vunpack.c.h.b16 %v544
    %v890 = vunpack.c.l.b16 %v545
    %v891 = vunpack.c.h.b16 %v545
    %v892 = vunpack.c.l.b16 %v546
    %v893 = vunpack.c.h.b16 %v546
    %v894 = vunpack.c.l.b16 %v547
    %v895 = vunpack.c.h.b16 %v547
    %v896 = vunpack.c.l.b16 %v548
    %v897 = vunpack.c.h.b16 %v548
    %v898 = vunpack.c.l.b16 %v549
    %v899 = vunpack.c.h.b16 %v549
    %v900 = vunpack.c.l.b16 %v550
    %v901 = vunpack.c.h.b16 %v550
    %v902 = vunpack.c.l.b16 %v551
    %v903 = vunpack.c.h.b16 %v551
    %v904 = vunpack.c.l.b16 %v552
    %v905 = vunpack.c.h.b16 %v552
    %v906 = vunpack.c.l.b16 %v553
    %v907 = vunpack.c.h.b16 %v553
    %v908 = vunpack.c.l.b16 %v554
    %v909 = vunpack.c.h.b16 %v554
    %v910 = vunpack.c.l.b16 %v555
    %v911 = vunpack.c.h.b16 %v555
    %v912 = vunpack.c.l.b16 %v556
    %v913 = vunpack.c.h.b16 %v556
    %v914 = vunpack.c.l.b16 %v557
    %v915 = vunpack.c.h.b16 %v557
    %v916 = vunpack.c.l.b16 %v558
    %v917 = vunpack.c.h.b16 %v558
    %v918 = vunpack.c.l.b16 %v559
    %v919 = vunpack.c.h.b16 %v559
    %v920 = vunpack.c.l.b16 %v560
    %v921 = vunpack.c.h.b16 %v560
    %v922 = vunpack.c.l.b16 %v561
    %v923 = vunpack.c.h.b16 %v561
    %v924 = vunpack.c.l.b16 %v562
    %v925 = vunpack.c.h.b16 %v562
    %v926 = vunpack.c.l.b16 %v563
    %v927 = vunpack.c.h.b16 %v563
    %v928 = vunpack.c.l.b16 %v564
    %v929 = vunpack.c.h.b16 %v564
    %v930 = vunpack.c.l.b16 %v565
    %v931 = vunpack.c.h.b16 %v565
    %v932 = vunpack.c.l.b16 %v566
    %v933 = vunpack.c.h.b16 %v566
    %v934 = vunpack.c.l.b16 %v567
    %v935 = vunpack.c.h.b16 %v567
    %v936 = vunpack.c.l.b16 %v568
    %v937 = vunpack.c.h.b16 %v568
    %v938 = vunpack.c.l.b16 %v569
    %v939 = vunpack.c.h.b16 %v569
    %v940 = vunpack.c.l.b16 %v570
    %v941 = vunpack.c.h.b16 %v570
    %v942 = vunpack.c.l.b16 %v571
    %v943 = vunpack.c.h.b16 %v571
    %v944 = vunpack.c.l.b16 %v572
    %v945 = vunpack.c.h.b16 %v572
    %v946 = vunpack.c.l.b16 %v573
    %v947 = vunpack.c.h.b16 %v573
    %v948 = vunpack.c.l.b16 %v574
    %v949 = vunpack.c.h.b16 %v574
    %v950 = vunpack.c.l.b16 %v575
    %v951 = vunpack.c.h.b16 %v575
    %v952 = vunpack.c.l.b16 %v576
    %v953 = vunpack.c.h.b16 %v576
    %v954 = vunpack.c.l.b16 %v577
    %v955 = vunpack.c.h.b16 %v577
    %v956 = vunpack.c.l.b16 %v578
    %v957 = vunpack.c.h.b16 %v578
    %v958 = vunpack.c.l.b16 %v579
    %v959 = vunpack.c.h.b16 %v579
    %v960 = vunpack.c.l.b16 %v580
    %v961 = vunpack.c.h.b16 %v580
    %v962 = vunpack.c.l.b16 %v581
    %v963 = vunpack.c.h.b16 %v581
    %v964 = vunpack.c.l.b16 %v582
    %v965 = vunpack.c.h.b16 %v582
    %v966 = vunpack.c.l.b16 %v583
    %v967 = vunpack.c.h.b16 %v583
    %v968 = vunpack.c.l.b16 %v584
    %v969 = vunpack.c.h.b16 %v584
    %v970 = vunpack.c.l.b16 %v585
    %v971 = vunpack.c.h.b16 %v585
    %v972 = vunpack.c.l.b16 %v586
    %v973 = vunpack.c.h.b16 %v586
    %v974 = vunpack.c.l.b16 %v587
    %v975 = vunpack.c.h.b16 %v587
    %v976 = vunpack.c.l.b16 %v588
    %v977 = vunpack.c.h.b16 %v588
    %v978 = vunpack.c.l.b16 %v589
    %v979 = vunpack.c.h.b16 %v589
    %v980 = vunpack.c.l.b16 %v590
    %v981 = vunpack.c.h.b16 %v590
    %v982 = vunpack.c.l.b16 %v591
    %v983 = vunpack.c.h.b16 %v591
    %v984 = vunpack.c.l.b16 %v592
    %v985 = vunpack.c.h.b16 %v592
    %v986 = vunpack.c.l.b16 %v593
    %v987 = vunpack.c.h.b16 %v593
    %v988 = vunpack.c.l.b16 %v594
    %v989 = vunpack.c.h.b16 %v594
    %v990 = vunpack.c.l.b16 %v595
    %v991 = vunpack.c.h.b16 %v595
    %v992 = vunpack.c.l.b16 %v596
    %v993 = vunpack.c.h.b16 %v596
    %v994 = vunpack.c.l.b16 %v597
    %v995 = vunpack.c.h.b16 %v597
    %v996 = vunpack.c.l.b16 %v598
    %v997 = vunpack.c.h.b16 %v598
    %v998 = vunpack.c.l.b16 %v599
    %v999 = vunpack.c.h.b16 %v599
    %v1000 = vunpack.c.l.b16 %v600
    %v1001 = vunpack.c.h.b16 %v600
    %v1002 = vunpack.c.l.b16 %v601
    %v1003 = vunpack.c.h.b16 %v601
    %v1004 = vunpack.c.l.b16 %v602
    %v1005 = vunpack.c.h.b16 %v602
    %v1006 = vunpack.c.l.b16 %v603
    %v1007 = vunpack.c.h.b16 %v603
    %v1008 = vunpack.c.l.b16 %v604
    %v1009 = vunpack.c.h.b16 %v604
    %v1010 = vunpack.c.l.b16 %v605
    %v1011 = vunpack.c.h.b16 %v605
    %v1012 = vunpack.c.l.b16 %v606
    %v1013 = vunpack.c.h.b16 %v606
    %v1014 = vunpack.c.l.b16 %v607
    %v1015 = vunpack.c.h.b16 %v607
    %v1016 = vunpack.c.l.b16 %v608
    %v1017 = vunpack.c.h.b16 %v608
    %v1018 = vunpack.c.l.b16 %v609
    %v1019 = vunpack.c.h.b16 %v609
    %v1020 = vunpack.c.l.b16 %v610
    %v1021 = vunpack.c.h.b16 %v610
    %v1022 = vunpack.c.l.b16 %v611
    %v1023 = vunpack.c.h.b16 %v611
    %v1024 = vunpack.c.l.b16 %v612
    %v1025 = vunpack.c.h.b16 %v612
    %v1026 = vunpack.c.l.b16 %v613
    %v1027 = vunpack.c.h.b16 %v613
    %v1028 = vunpack.c.l.b16 %v614
    %v1029 = vunpack.c.h.b16 %v614
    %v1030 = vunpack.c.l.b16 %v615
    %v1031 = vunpack.c.h.b16 %v615
    %v1032 = vunpack.c.l.b16 %v616
    %v1033 = vunpack.c.h.b16 %v616
    %v1034 = vunpack.c.l.b16 %v617
    %v1035 = vunpack.c.h.b16 %v617
    %v1036 = vunpack.c.l.b16 %v618
    %v1037 = vunpack.c.h.b16 %v618
    %v1038 = vunpack.c.l.b16 %v619
    %v1039 = vunpack.c.h.b16 %v619
    %v1040 = vunpack.c.l.b16 %v620
    %v1041 = vunpack.c.h.b16 %v620
    %v1042 = vunpack.c.l.b16 %v621
    %v1043 = vunpack.c.h.b16 %v621
    %v1044 = vunpack.c.l.b16 %v622
    %v1045 = vunpack.c.h.b16 %v622
    %v1046 = vunpack.c.l.b16 %v623
    %v1047 = vunpack.c.h.b16 %v623
    %v1048 = vunpack.c.l.b16 %v624
    %v1049 = vunpack.c.h.b16 %v624
    %v1050 = vunpack.c.l.b16 %v625
    %v1051 = vunpack.c.h.b16 %v625
    %v1052 = vpack.c.b16 %v804, %v796
    %v1053 = vpack.c.b16 %v805, %v797
    %v1054 = vpack.c.b16 %v806, %v798
    %v1055 = vpack.c.b16 %v807, %v799
    %v1056 = vpack.c.b16 %v808, %v800
    %v1057 = vpack.c.b16 %v809, %v801
    %v1058 = vpack.c.b16 %v810, %v802
    %v1059 = vpack.c.b16 %v811, %v803
    %v1060 = vpack.c.b16 %v820, %v812
    %v1061 = vpack.c.b16 %v821, %v813
    %v1062 = vpack.c.b16 %v822, %v814
    %v1063 = vpack.c.b16 %v823, %v815
    %v1064 = vpack.c.b16 %v824, %v816
    %v1065 = vpack.c.b16 %v825, %v817
    %v1066 = vpack.c.b16 %v826, %v818
    %v1067 = vpack.c.b16 %v827, %v819
    %v1068 = vpack.c.b16 %v836, %v828
    %v1069 = vpack.c.b16 %v837, %v829
    %v1070 = vpack.c.b16 %v838, %v830
    %v1071 = vpack.c.b16 %v839, %v831
    %v1072 = vpack.c.b16 %v840, %v832
    %v1073 = vpack.c.b16 %v841, %v833
    %v1074 = vpack.c.b16 %v842, %v834
    %v1075 = vpack.c.b16 %v843, %v835
    %v1076 = vpack.c.b16 %v852, %v844
    %v1077 = vpack.c.b16 %v853, %v845
    %v1078 = vpack.c.b16 %v854, %v846
    %v1079 = vpack.c.b16 %v855, %v847
    %v1080 = vpack.c.b16 %v856, %v848
    %v1081 = vpack.c.b16 %v857, %v849
    %v1082 = vpack.c.b16 %v858, %v850
    %v1083 = vpack.c.b16 %v859, %v851
    %v1084 = vpack.c.b16 %v868, %v860
    %v1085 = vpack.c.b16 %v869, %v861
    %v1086 = vpack.c.b16 %v870, %v862
    %v1087 = vpack.c.b16 %v871, %v863
    %v1088 = vpack.c.b16 %v872, %v864
    %v1089 = vpack.c.b16 %v873, %v865
    %v1090 = vpack.c.b16 %v874, %v866
    %v1091 = vpack.c.b16 %v875, %v867
    %v1092 = vpack.c.b16 %v884, %v876
    %v1093 = vpack.c.b16 %v885, %v877
    %v1094 = vpack.c.b16 %v886, %v878
    %v1095 = vpack.c.b16 %v887, %v879
    %v1096 = vpack.c.b16 %v888, %v880
    %v1097 = vpack.c.b16 %v889, %v881
    %v1098 = vpack.c.b16 %v890, %v882
    %v1099 = vpack.c.b16 %v891, %v883
    %v1100 = vpack.c.b16 %v900, %v892
    %v1101 = vpack.c.b16 %v901, %v893
    %v1102 = vpack.c.b16 %v902, %v894
    %v1103 = vpack.c.b16 %v903, %v895
    %v1104 = vpack.c.b16 %v904, %v896
    %v1105 = vpack.c.b16 %v905, %v897
    %v1106 = vpack.c.b16 %v906, %v898
    %v1107 = vpack.c.b16 %v907, %v899
    %v1108 = vpack.c.b16 %v916, %v908
    %v1109 = vpack.c.b16 %v917, %v909
    %v1110 = vpack.c.b16 %v918, %v910
    %v1111 = vpack.c.b16 %v919, %v911
    %v1112 = vpack.c.b16 %v920, %v912
    %v1113 = vpack.c.b16 %v921, %v913
    %v1114 = vpack.c.b16 %v922, %v914
    %v1115 = vpack.c.b16 %v923, %v915
    %v1116 = vpack.c.b16 %v932, %v924
    %v1117 = vpack.c.b16 %v933, %v925
    %v1118 = vpack.c.b16 %v934, %v926
    %v1119 = vpack.c.b16 %v935, %v927
    %v1120 = vpack.c.b16 %v936, %v928
    %v1121 = vpack.c.b16 %v937, %v929
    %v1122 = vpack.c.b16 %v938, %v930
    %v1123 = vpack.c.b16 %v939, %v931
    %v1124 = vpack.c.b16 %v948, %v940
    %v1125 = vpack.c.b16 %v949, %v941
    %v1126 = vpack.c.b16 %v950, %v942
    %v1127 = vpack.c.b16 %v951, %v943
    %v1128 = vpack.c.b16 %v952, %v944
    %v1129 = vpack.c.b16 %v953, %v945
    %v1130 = vpack.c.b16 %v954, %v946
    %v1131 = vpack.c.b16 %v955, %v947
    %v1132 = vpack.c.b16 %v964, %v956
    %v1133 = vpack.c.b16 %v965, %v957
    %v1134 = vpack.c.b16 %v966, %v958
    %v1135 = vpack.c.b16 %v967, %v959
    %v1136 = vpack.c.b16 %v968, %v960
    %v1137 = vpack.c.b16 %v969, %v961
    %v1138 = vpack.c.b16 %v970, %v962
    %v1139 = vpack.c.b16 %v971, %v963
    %v1140 = vpack.c.b16 %v980, %v972
    %v1141 = vpack.c.b16 %v981, %v973
    %v1142 = vpack.c.b16 %v982, %v974
    %v1143 = vpack.c.b16 %v983, %v975
    %v1144 = vpack.c.b16 %v984, %v976
    %v1145 = vpack.c.b16 %v985, %v977
    %v1146 = vpack.c.b16 %v986, %v978
    %v1147 = vpack.c.b16 %v987, %v979
    %v1148 = vpack.c.b16 %v996, %v988
    %v1149 = vpack.c.b16 %v997, %v989
    %v1150 = vpack.c.b16 %v998, %v990
    %v1151 = vpack.c.b16 %v999, %v991
    %v1152 = vpack.c.b16 %v1000, %v992
    %v1153 = vpack.c.b16 %v1001, %v993
    %v1154 = vpack.c.b16 %v1002, %v994
    %v1155 = vpack.c.b16 %v1003, %v995
    %v1156 = vpack.c.b16 %v1012, %v1004
    %v1157 = vpack.c.b16 %v1013, %v1005
    %v1158 = vpack.c.b16 %v1014, %v1006
    %v1159 = vpack.c.b16 %v1015, %v1007
    %v1160 = vpack.c.b16 %v1016, %v1008
    %v1161 = vpack.c.b16 %v1017, %v1009
    %v1162 = vpack.c.b16 %v1018, %v1010
    %v1163 = vpack.c.b16 %v1019, %v1011
    %v1164 = vpack.c.b16 %v1028, %v1020
    %v1165 = vpack.c.b16 %v1029, %v1021
    %v1166 = vpack.c.b16 %v1030, %v1022
    %v1167 = vpack.c.b16 %v1031, %v1023
    %v1168 = vpack.c.b16 %v1032, %v1024
    %v1169 = vpack.c.b16 %v1033, %v1025
    %v1170 = vpack.c.b16 %v1034, %v1026
    %v1171 = vpack.c.b16 %v1035, %v1027
    %v1172 = vpack.c.b16 %v1044, %v1036
    %v1173 = vpack.c.b16 %v1045, %v1037
    %v1174 = vpack.c.b16 %v1046, %v1038
    %v1175 = vpack.c.b16 %v1047, %v1039
    %v1176 = vpack.c.b16 %v1048, %v1040
    %v1177 = vpack.c.b16 %v1049, %v1041
    %v1178 = vpack.c.b16 %v1050, %v1042
    %v1179 = vpack.c.b16 %v1051, %v1043
    %1308 = vmatprep.subr.bf16.mxu0 %v1109
    %1309 = vmatpush1.bf16.msra.mxu0 %v1108
    %1310 = vmatprep.subr.bf16.mxu0 %v1101
    %1311 = vmatpush1.bf16.msra.mxu0 %v1100
    %1312 = vmatprep.subr.bf16.mxu0 %v1093
    %1313 = vmatpush1.bf16.msra.mxu0 %v1092
    %1314 = vmatprep.subr.bf16.mxu0 %v1085
    %1315 = vmatpush1.bf16.msra.mxu0 %v1084
    %1316 = vmatprep.subr.bf16.mxu0 %v1077
    %1317 = vmatpush1.bf16.msra.mxu0 %v1076
    %1318 = vmatprep.subr.bf16.mxu0 %v1069
    %1319 = vmatpush1.bf16.msra.mxu0 %v1068
    %1320 = vmatprep.subr.bf16.mxu0 %v1061
    %1321 = vmatpush1.bf16.msra.mxu0 %v1060
    %1322 = vmatprep.subr.bf16.mxu0 %v1053
    %1323 = vmatpush1.bf16.msra.mxu0 %v1052
    %1324 = vmatprep.subr.bf16.mxu0 %v1173
    %1325 = vmatpush2.bf16.msra.mxu0 %v1172
    %1326 = vmatprep.subr.bf16.mxu0 %v1165
    %1327 = vmatpush2.bf16.msra.mxu0 %v1164
    %1328 = vmatprep.subr.bf16.mxu0 %v1157
    %1329 = vmatpush2.bf16.msra.mxu0 %v1156
    %1330 = vmatprep.subr.bf16.mxu0 %v1149
    %1331 = vmatpush2.bf16.msra.mxu0 %v1148
    %1332 = vmatprep.subr.bf16.mxu0 %v1141
    %1333 = vmatpush2.bf16.msra.mxu0 %v1140
    %1334 = vmatprep.subr.bf16.mxu0 %v1133
    %1335 = vmatpush2.bf16.msra.mxu0 %v1132
    %1336 = vmatprep.subr.bf16.mxu0 %v1125
    %1337 = vmatpush2.bf16.msra.mxu0 %v1124
    %1338 = vmatprep.subr.bf16.mxu0 %v1117
    %1339 = vmatpush2.bf16.msra.mxu0 %v1116
    %1340 = vmatprep.mubr.bf16.mxu0 %v497
    %1341 = vmatmul.mubr.bf16.gmra.mxu0 %v496
    %v1342 = vpop.f32.mrf.mxu0
    %v1343 = vadd.f32 %v631, %v1342
    %v1344 = vpop.f32.mrf.mxu0
    %v1345 = vadd.f32 %v635, %v1344
    %v1346 = vpop.f32.mrf.mxu0
    %v1347 = vadd.f32 %v631, %v1346
    %v1348 = vpop.f32.mrf.mxu0
    %v1349 = vadd.f32 %v635, %v1348
    %1350 = vdwg.mxu0
    %1351 = vmatprep.subr.bf16.mxu0 %v1111
    %1352 = vmatpush1.bf16.msra.mxu0 %v1110
    %1353 = vmatprep.subr.bf16.mxu0 %v1103
    %1354 = vmatpush1.bf16.msra.mxu0 %v1102
    %1355 = vmatprep.subr.bf16.mxu0 %v1095
    %1356 = vmatpush1.bf16.msra.mxu0 %v1094
    %1357 = vmatprep.subr.bf16.mxu0 %v1087
    %1358 = vmatpush1.bf16.msra.mxu0 %v1086
    %1359 = vmatprep.subr.bf16.mxu0 %v1079
    %1360 = vmatpush1.bf16.msra.mxu0 %v1078
    %1361 = vmatprep.subr.bf16.mxu0 %v1071
    %1362 = vmatpush1.bf16.msra.mxu0 %v1070
    %1363 = vmatprep.subr.bf16.mxu0 %v1063
    %1364 = vmatpush1.bf16.msra.mxu0 %v1062
    %1365 = vmatprep.subr.bf16.mxu0 %v1055
    %1366 = vmatpush1.bf16.msra.mxu0 %v1054
    %1367 = vmatprep.subr.bf16.mxu0 %v1175
    %1368 = vmatpush2.bf16.msra.mxu0 %v1174
    %1369 = vmatprep.subr.bf16.mxu0 %v1167
    %1370 = vmatpush2.bf16.msra.mxu0 %v1166
    %1371 = vmatprep.subr.bf16.mxu0 %v1159
    %1372 = vmatpush2.bf16.msra.mxu0 %v1158
    %1373 = vmatprep.subr.bf16.mxu0 %v1151
    %1374 = vmatpush2.bf16.msra.mxu0 %v1150
    %1375 = vmatprep.subr.bf16.mxu0 %v1143
    %1376 = vmatpush2.bf16.msra.mxu0 %v1142
    %1377 = vmatprep.subr.bf16.mxu0 %v1135
    %1378 = vmatpush2.bf16.msra.mxu0 %v1134
    %1379 = vmatprep.subr.bf16.mxu0 %v1127
    %1380 = vmatpush2.bf16.msra.mxu0 %v1126
    %1381 = vmatprep.subr.bf16.mxu0 %v1119
    %1382 = vmatpush2.bf16.msra.mxu0 %v1118
    %1383 = vmatprep.mubr.bf16.mxu0 %v497
    %1384 = vmatmul.mubr.bf16.gmra.mxu0 %v496
    %v1385 = vpop.f32.mrf.mxu0
    %v1386 = vadd.f32 %v639, %v1385
    %v1387 = vpop.f32.mrf.mxu0
    %v1388 = vadd.f32 %v643, %v1387
    %v1389 = vpop.f32.mrf.mxu0
    %v1390 = vadd.f32 %v639, %v1389
    %v1391 = vpop.f32.mrf.mxu0
    %v1392 = vadd.f32 %v643, %v1391
    %1393 = vdwg.mxu0
    %1394 = vmatprep.subr.bf16.mxu0 %v1113
    %1395 = vmatpush1.bf16.msra.mxu0 %v1112
    %1396 = vmatprep.subr.bf16.mxu0 %v1105
    %1397 = vmatpush1.bf16.msra.mxu0 %v1104
    %1398 = vmatprep.subr.bf16.mxu0 %v1097
    %1399 = vmatpush1.bf16.msra.mxu0 %v1096
    %1400 = vmatprep.subr.bf16.mxu0 %v1089
    %1401 = vmatpush1.bf16.msra.mxu0 %v1088
    %1402 = vmatprep.subr.bf16.mxu0 %v1081
    %1403 = vmatpush1.bf16.msra.mxu0 %v1080
    %1404 = vmatprep.subr.bf16.mxu0 %v1073
    %1405 = vmatpush1.bf16.msra.mxu0 %v1072
    %1406 = vmatprep.subr.bf16.mxu0 %v1065
    %1407 = vmatpush1.bf16.msra.mxu0 %v1064
    %1408 = vmatprep.subr.bf16.mxu0 %v1057
    %1409 = vmatpush1.bf16.msra.mxu0 %v1056
    %1410 = vmatprep.subr.bf16.mxu0 %v1177
    %1411 = vmatpush2.bf16.msra.mxu0 %v1176
    %1412 = vmatprep.subr.bf16.mxu0 %v1169
    %1413 = vmatpush2.bf16.msra.mxu0 %v1168
    %1414 = vmatprep.subr.bf16.mxu0 %v1161
    %1415 = vmatpush2.bf16.msra.mxu0 %v1160
    %1416 = vmatprep.subr.bf16.mxu0 %v1153
    %1417 = vmatpush2.bf16.msra.mxu0 %v1152
    %1418 = vmatprep.subr.bf16.mxu0 %v1145
    %1419 = vmatpush2.bf16.msra.mxu0 %v1144
    %1420 = vmatprep.subr.bf16.mxu0 %v1137
    %1421 = vmatpush2.bf16.msra.mxu0 %v1136
    %1422 = vmatprep.subr.bf16.mxu0 %v1129
    %1423 = vmatpush2.bf16.msra.mxu0 %v1128
    %1424 = vmatprep.subr.bf16.mxu0 %v1121
    %1425 = vmatpush2.bf16.msra.mxu0 %v1120
    %1426 = vmatprep.mubr.bf16.mxu0 %v497
    %1427 = vmatmul.mubr.bf16.gmra.mxu0 %v496
    %v1428 = vpop.f32.mrf.mxu0
    %v1429 = vadd.f32 %v647, %v1428
    %v1430 = vpop.f32.mrf.mxu0
    %v1431 = vadd.f32 %v651, %v1430
    %v1432 = vpop.f32.mrf.mxu0
    %v1433 = vadd.f32 %v647, %v1432
    %v1434 = vpop.f32.mrf.mxu0
    %v1435 = vadd.f32 %v651, %v1434
    %1436 = vdwg.mxu0
    %1437 = vmatprep.subr.bf16.mxu0 %v1115
    %1438 = vmatpush1.bf16.msra.mxu0 %v1114
    %1439 = vmatprep.subr.bf16.mxu0 %v1107
    %1440 = vmatpush1.bf16.msra.mxu0 %v1106
    %1441 = vmatprep.subr.bf16.mxu0 %v1099
    %1442 = vmatpush1.bf16.msra.mxu0 %v1098
    %1443 = vmatprep.subr.bf16.mxu0 %v1091
    %1444 = vmatpush1.bf16.msra.mxu0 %v1090
    %1445 = vmatprep.subr.bf16.mxu0 %v1083
    %1446 = vmatpush1.bf16.msra.mxu0 %v1082
    %1447 = vmatprep.subr.bf16.mxu0 %v1075
    %1448 = vmatpush1.bf16.msra.mxu0 %v1074
    %1449 = vmatprep.subr.bf16.mxu0 %v1067
    %1450 = vmatpush1.bf16.msra.mxu0 %v1066
    %1451 = vmatprep.subr.bf16.mxu0 %v1059
    %1452 = vmatpush1.bf16.msra.mxu0 %v1058
    %1453 = vmatprep.subr.bf16.mxu0 %v1179
    %1454 = vmatpush2.bf16.msra.mxu0 %v1178
    %1455 = vmatprep.subr.bf16.mxu0 %v1171
    %1456 = vmatpush2.bf16.msra.mxu0 %v1170
    %1457 = vmatprep.subr.bf16.mxu0 %v1163
    %1458 = vmatpush2.bf16.msra.mxu0 %v1162
    %1459 = vmatprep.subr.bf16.mxu0 %v1155
    %1460 = vmatpush2.bf16.msra.mxu0 %v1154
    %1461 = vmatprep.subr.bf16.mxu0 %v1147
    %1462 = vmatpush2.bf16.msra.mxu0 %v1146
    %1463 = vmatprep.subr.bf16.mxu0 %v1139
    %1464 = vmatpush2.bf16.msra.mxu0 %v1138
    %1465 = vmatprep.subr.bf16.mxu0 %v1131
    %1466 = vmatpush2.bf16.msra.mxu0 %v1130
    %1467 = vmatprep.subr.bf16.mxu0 %v1123
    %1468 = vmatpush2.bf16.msra.mxu0 %v1122
    %1469 = vmatprep.mubr.bf16.mxu0 %v497
    %1470 = vmatmul.mubr.bf16.gmra.mxu0 %v496
    %v1471 = vpop.f32.mrf.mxu0
    %v1472 = vadd.f32 %v655, %v1471
    %v1473 = vpop.f32.mrf.mxu0
    %v1474 = vadd.f32 %v659, %v1473
    %v1475 = vpop.f32.mrf.mxu0
    %v1476 = vadd.f32 %v655, %v1475
    %v1477 = vpop.f32.mrf.mxu0
    %v1478 = vadd.f32 %v659, %v1477
    %1479 = vdwg.mxu0
    %1480 = vst [vmem:[#allocation12] sm:$0xff] %v1343
    %1481 = vst [vmem:[#allocation12 + $0x8] sm:$0xff] %v1345
    %1482 = vst [vmem:[#allocation12 + $0x10] sm:$0xff] %v1386
    %1483 = vst [vmem:[#allocation12 + $0x18] sm:$0xff] %v1388
    %1484 = vst [vmem:[#allocation12 + $0x20] sm:$0xff] %v1429
    %1485 = vst [vmem:[#allocation12 + $0x28] sm:$0xff] %v1431
    %1486 = vst [vmem:[#allocation12 + $0x30] sm:$0xff] %v1472
    %1487 = vst [vmem:[#allocation12 + $0x38] sm:$0xff] %v1474
    %1488 = vst [vmem:[#allocation12 + $0x40] sm:$0xff] %v1347
    %1489 = vst [vmem:[#allocation12 + $0x48] sm:$0xff] %v1349
    %1490 = vst [vmem:[#allocation12 + $0x50] sm:$0xff] %v1390
    %1491 = vst [vmem:[#allocation12 + $0x58] sm:$0xff] %v1392
    %1492 = vst [vmem:[#allocation12 + $0x60] sm:$0xff] %v1433
    %1493 = vst [vmem:[#allocation12 + $0x68] sm:$0xff] %v1435
    %1494 = vst [vmem:[#allocation12 + $0x70] sm:$0xff] %v1476
    %1495 = vst [vmem:[#allocation12 + $0x78] sm:$0xff] %v1478
    // Predicated region
    $region46: #{tpu_custom_call.1} parent=1 // pred_check
      _
    $region47: #{tpu_custom_call.1} parent=1 // pred_check_branch
      %1497 = sbr.rel (0) target = $region49
    $region48: #{tpu_custom_call.1} parent=1 // pred_region
      %s1499 = ssub.s32 2048, 2048
      %1500 = vsyncadd [#allocation6], %s1499
      %s1501 = sshll.u32 [#allocation12], 4
      %s1502 = int_to_ptr.vmem [resolvable:$true] %s1501
      %1507 = dma.vmem_to_hbm [thread:$0]  %s1502, 2048, %s8, [#allocation6], 1024, 1024, 64
    $region49: #{tpu_custom_call.1} parent=1 // pred_fallthru
      _
    // Predicated region
    $region50: #{tpu_custom_call.1} parent=1 // pred_check
      _
    $region51: #{tpu_custom_call.1} parent=1 // pred_check_branch
      %1509 = sbr.rel (0) target = $region53
    $region52: #{tpu_custom_call.1} parent=1 // pred_region
      %1510 = dma.done [#allocation6], 2048
    $region53: #{tpu_custom_call.1} parent=1 // pred_fallthru
      _
    %1511 = vsyncpa [#allocation5], 1
    %1512 = vsyncpa [#allocation8], 1
    %1513 = vsyncpa [#allocation11], 1
    %1514 = vsyncpa [#allocation6], 1

</llo_original>
